<compile_context>
chip_gen: v5e
topology: v5e:2x2
jax: 0.10.0
libtpu: 0.0.40
codegen_flags: <defaults>
</compile_context>

<pallas_src>
import functools

import jax
import jax.numpy as jnp
from jax.experimental import pallas as pl
from jax.experimental.pallas import tpu as pltpu

BN_EPS = 1e-5
_VMEM_LIMIT_BYTES = 48 * 1024 * 1024   # headroom under v7x's 64 MiB physical VMEM


# --------------------------------------------------------------------------
# Kernels
# --------------------------------------------------------------------------
def _layer1_kernel(data_ref, mask_ref, w1a_ref, w1b_ref, b1_ref,
                   h1_ref, sum_ref, sq_ref,
                   *, b_true, tile_b, mask_rows, mm_dtype):
    i = pl.program_id(0)
    # Split first matmul instead of concat([data, mask], axis=1).
    h = jnp.dot(data_ref[...].astype(mm_dtype), w1a_ref[...],
                preferred_element_type=jnp.float32)
    h = h + jnp.dot(mask_ref[...].astype(mm_dtype), w1b_ref[...],
                    preferred_element_type=jnp.float32)
    h = jnp.maximum(h + b1_ref[...], 0.0)
    if mask_rows:  # zero padded batch rows so they don't pollute BN statistics
        rows = i * tile_b + jax.lax.broadcasted_iota(jnp.int32, h.shape, 0)
        h = jnp.where(rows < b_true, h, 0.0)
    h1_ref[...] = h

    # Fused one-pass BN stats: per-feature sum and sum-of-squares, accumulated
    # into a resident output block across the (arbitrary) batch grid axis.
    s = jnp.sum(h, axis=0, keepdims=True)
    q = jnp.sum(h * h, axis=0, keepdims=True)

    @pl.when(i == 0)
    def _():
        sum_ref[...] = s
        sq_ref[...] = q

    @pl.when(i != 0)
    def _():
        sum_ref[...] += s
        sq_ref[...] += q


def _layer2_kernel(h1_ref, scale1_ref, shift1_ref, w2_ref, b2_ref,
                   h2_ref, sum_ref, sq_ref,
                   *, b_true, tile_b, mask_rows, mm_dtype):
    i = pl.program_id(0)
    # Folded BatchNorm: single mul + add per element.
    hbn = h1_ref[...] * scale1_ref[...] + shift1_ref[...]
    h = jnp.dot(hbn.astype(mm_dtype), w2_ref[...],
                preferred_element_type=jnp.float32)
    h = jnp.maximum(h + b2_ref[...], 0.0)
    if mask_rows:
        rows = i * tile_b + jax.lax.broadcasted_iota(jnp.int32, h.shape, 0)
        h = jnp.where(rows < b_true, h, 0.0)
    h2_ref[...] = h

    s = jnp.sum(h, axis=0, keepdims=True)
    q = jnp.sum(h * h, axis=0, keepdims=True)

    @pl.when(i == 0)
    def _():
        sum_ref[...] = s
        sq_ref[...] = q

    @pl.when(i != 0)
    def _():
        sum_ref[...] += s
        sq_ref[...] += q


def _layer3_kernel(h2_ref, scale2_ref, shift2_ref, w3_ref, b3_ref, out_ref,
                   *, mm_dtype):
    hbn = h2_ref[...] * scale2_ref[...] + shift2_ref[...]
    logits = jnp.dot(hbn.astype(mm_dtype), w3_ref[...],
                     preferred_element_type=jnp.float32) + b3_ref[...]
    out_ref[...] = jax.nn.sigmoid(logits).astype(out_ref.dtype)


# --------------------------------------------------------------------------
# Wrapper
# --------------------------------------------------------------------------
def _round_up(x, m):
    return ((x + m - 1) // m) * m


def _pad2(x, rows, cols):
    return jnp.pad(x, ((0, rows - x.shape[0]), (0, cols - x.shape[1])))


def _bn_fold(s, q, gamma, beta, n, use_bn):
    """Fold training-mode BatchNorm1d (biased var, eps=1e-5) into scale/shift."""
    if not use_bn:
        return jnp.ones_like(s), jnp.zeros_like(s)
    mean = s / n
    var = jnp.maximum(q / n - mean * mean, 0.0)  # fused E[x^2]-mean^2, clamped
    scale = gamma * jax.lax.rsqrt(var + BN_EPS)
    shift = beta - mean * scale
    return scale, shift


def imputation_forward(data, mask, params, use_BN=True,
                       matmul_dtype=jnp.float32,
                       vmem_budget_bytes=24 * 1024 * 1024):
    """GAIN Imputation_model forward. data/mask: [B, dim] -> G_prob [B, dim]."""
    B, dim = data.shape
    w1, b1, g1, be1, w2, b2, g2, be2, w3, b3 = params
    hd1 = w1.shape[1]
    hd2 = w2.shape[1]
    f32 = jnp.float32

    # --- lane-dense padding: feature dims -> multiples of 128 ---
    dim_p = _round_up(dim, 128)
    h1_p = _round_up(hd1, 128)
    h2_p = _round_up(hd2, 128)

    # --- batch tile sized against the VMEM budget (v7x-safe) ---
    w_isz = jnp.dtype(matmul_dtype).itemsize
    weight_bytes = 2 * w_isz * max(2 * dim_p * h1_p, h1_p * h2_p, h2_p * dim_p)
    avail = max(vmem_budget_bytes - weight_bytes, 2 * 1024 * 1024)
    bytes_per_row = 4 * 2 * (2 * dim_p + h1_p + h2_p + dim_p)  # 2x = double buffer
    tile_b = max(8, min(2048, avail // bytes_per_row))
    tile_b = (tile_b // 8) * 8
    tile_b = min(tile_b, _round_up(B, 8))
    b_pad = _round_up(B, tile_b)
    grid = (b_pad // tile_b,)
    mask_rows = b_pad != B

    # --- pad / split / cast parameters ---
    data_p = _pad2(data.astype(f32), b_pad, dim_p)
    mask_p = _pad2(mask.astype(f32), b_pad, dim_p)
    w1a = _pad2(w1[:dim].astype(f32), dim_p, h1_p).astype(matmul_dtype)
    w1b = _pad2(w1[dim:].astype(f32), dim_p, h1_p).astype(matmul_dtype)
    w2p = _pad2(w2.astype(f32), h1_p, h2_p).astype(matmul_dtype)
    w3p = _pad2(w3.astype(f32), h2_p, dim_p).astype(matmul_dtype)
    b1p = _pad2(b1.reshape(1, -1).astype(f32), 1, h1_p)
    b2p = _pad2(b2.reshape(1, -1).astype(f32), 1, h2_p)
    b3p = _pad2(b3.reshape(1, -1).astype(f32), 1, dim_p)
    g1p = _pad2(g1.reshape(1, -1).astype(f32), 1, h1_p)
    be1p = _pad2(be1.reshape(1, -1).astype(f32), 1, h1_p)
    g2p = _pad2(g2.reshape(1, -1).astype(f32), 1, h2_p)
    be2p = _pad2(be2.reshape(1, -1).astype(f32), 1, h2_p)

    def acts_spec(width):
        return pl.BlockSpec((tile_b, width), lambda i: (i, 0))

    def full_spec(rows, cols):
        return pl.BlockSpec((rows, cols), lambda i: (0, 0))   # resident weights

    def vec_spec(width):
        return pl.BlockSpec((1, width), lambda i: (0, 0))

    # ---- Pass 1: split matmul + bias + relu, accumulate BN1 stats ----
    cost1 = pl.CostEstimate(
        flops=4 * b_pad * dim_p * h1_p,
        transcendentals=0,
        bytes_accessed=int(4 * b_pad * (2 * dim_p + h1_p)
                           + 2 * w_isz * dim_p * h1_p + 4 * 3 * h1_p))
    h1_pre, s1, q1 = pl.pallas_call(
        functools.partial(_layer1_kernel, b_true=B, tile_b=tile_b,
                          mask_rows=mask_rows, mm_dtype=matmul_dtype),
        grid=grid,
        in_specs=[acts_spec(dim_p), acts_spec(dim_p),
                  full_spec(dim_p, h1_p), full_spec(dim_p, h1_p),
                  vec_spec(h1_p)],
        out_specs=[acts_spec(h1_p), vec_spec(h1_p), vec_spec(h1_p)],
        out_shape=[jax.ShapeDtypeStruct((b_pad, h1_p), f32),
                   jax.ShapeDtypeStruct((1, h1_p), f32),
                   jax.ShapeDtypeStruct((1, h1_p), f32)],
        compiler_params=pltpu.CompilerParams(
            dimension_semantics=("arbitrary",),   # resident BN-stat accumulator
            vmem_limit_bytes=_VMEM_LIMIT_BYTES),
        cost_estimate=cost1,
    )(data_p, mask_p, w1a, w1b, b1p)

    scale1, shift1 = _bn_fold(s1, q1, g1p, be1p, B, use_BN)

    # ---- Pass 2: BN1 (folded) + matmul + bias + relu, accumulate BN2 stats ----
    cost2 = pl.CostEstimate(
        flops=2 * b_pad * h1_p * h2_p,
        transcendentals=0,
        bytes_accessed=int(4 * b_pad * (h1_p + h2_p)
                           + w_isz * h1_p * h2_p + 4 * 5 * h2_p))
    h2_pre, s2, q2 = pl.pallas_call(
        functools.partial(_layer2_kernel, b_true=B, tile_b=tile_b,
                          mask_rows=mask_rows, mm_dtype=matmul_dtype),
        grid=grid,
        in_specs=[acts_spec(h1_p), vec_spec(h1_p), vec_spec(h1_p),
                  full_spec(h1_p, h2_p), vec_spec(h2_p)],
        out_specs=[acts_spec(h2_p), vec_spec(h2_p), vec_spec(h2_p)],
        out_shape=[jax.ShapeDtypeStruct((b_pad, h2_p), f32),
                   jax.ShapeDtypeStruct((1, h2_p), f32),
                   jax.ShapeDtypeStruct((1, h2_p), f32)],
        compiler_params=pltpu.CompilerParams(
            dimension_semantics=("arbitrary",),
            vmem_limit_bytes=_VMEM_LIMIT_BYTES),
        cost_estimate=cost2,
    )(h1_pre, scale1, shift1, w2p, b2p)

    scale2, shift2 = _bn_fold(s2, q2, g2p, be2p, B, use_BN)

    # ---- Pass 3: BN2 (folded) + matmul + bias + sigmoid ----
    cost3 = pl.CostEstimate(
        flops=2 * b_pad * h2_p * dim_p,
        transcendentals=b_pad * dim_p,
        bytes_accessed=int(4 * b_pad * (h2_p + dim_p)
                           + w_isz * h2_p * dim_p + 4 * 3 * dim_p))
    out_p = pl.pallas_call(
        functools.partial(_layer3_kernel, mm_dtype=matmul_dtype),
        grid=grid,
        in_specs=[acts_spec(h2_p), vec_spec(h2_p), vec_spec(h2_p),
                  full_spec(h2_p, dim_p), vec_spec(dim_p)],
        out_specs=acts_spec(dim_p),
        out_shape=jax.ShapeDtypeStruct((b_pad, dim_p), f32),
        compiler_params=pltpu.CompilerParams(
            dimension_semantics=("parallel",),    # no cross-tile coupling here
            vmem_limit_bytes=_VMEM_LIMIT_BYTES),
        cost_estimate=cost3,
    )(h2_pre, scale2, shift2, w3p, b3p)

    # TODO(synk): PyTorch BatchNorm1d also updates running_mean/running_var with
    # momentum as a training-mode side effect; that stateful update is not
    # produced here (the batch mean/var themselves are computed in-kernel).
    return out_p[:B, :dim]


# --------------------------------------------------------------------------
# Parameters, reference, self-test
# --------------------------------------------------------------------------
def init_params(key, dim, hidden_dim1, hidden_dim2):
    """xavier_init(size): std = 1/sqrt(in_dim/2); BN gamma=1, beta=0."""
    k1, k2, k3 = jax.random.split(key, 3)

    def xavier(k, in_dim, out_dim):
        std = 1.0 / jnp.sqrt(in_dim / 2.0)
        return jax.random.normal(k, (in_dim, out_dim), dtype=jnp.float32) * std

    w1 = xavier(k1, dim * 2, hidden_dim1)
    b1 = jnp.zeros((hidden_dim1,), jnp.float32)
    g1 = jnp.ones((hidden_dim1,), jnp.float32)
    be1 = jnp.zeros((hidden_dim1,), jnp.float32)
    w2 = xavier(k2, hidden_dim1, hidden_dim2)
    b2 = jnp.zeros((hidden_dim2,), jnp.float32)
    g2 = jnp.ones((hidden_dim2,), jnp.float32)
    be2 = jnp.zeros((hidden_dim2,), jnp.float32)
    w3 = xavier(k3, hidden_dim2, dim)
    b3 = jnp.zeros((dim,), jnp.float32)
    return (w1, b1, g1, be1, w2, b2, g2, be2, w3, b3)


def reference_forward(data, mask, params, use_BN=True):
    """Pure-JAX reference (PyTorch BatchNorm1d training-mode semantics)."""
    (w1, b1, g1, be1, w2, b2, g2, be2, w3, b3) = params
    x = jnp.concatenate([data, mask], axis=1)
    h1 = jnp.maximum(x @ w1 + b1, 0.0)
    if use_BN:
        m1 = h1.mean(0, keepdims=True)
        v1 = ((h1 - m1) ** 2).mean(0, keepdims=True)
        h1 = (h1 - m1) / jnp.sqrt(v1 + BN_EPS) * g1 + be1
    h2 = jnp.maximum(h1 @ w2 + b2, 0.0)
    if use_BN:
        m2 = h2.mean(0, keepdims=True)
        v2 = ((h2 - m2) ** 2).mean(0, keepdims=True)
        h2 = (h2 - m2) / jnp.sqrt(v2 + BN_EPS) * g2 + be2
    return jax.nn.sigmoid(h2 @ w3 + b3)


if __name__ == "__main__":
    key = jax.random.PRNGKey(0)
    kd, km, kp = jax.random.split(key, 3)

    B, dim, hd1, hd2 = 8, 16, 32, 32
    data = jax.random.uniform(kd, (B, dim), dtype=jnp.float32)
    mask = (jax.random.uniform(km, (B, dim)) > 0.3).astype(jnp.float32)
    params = init_params(kp, dim, hd1, hd2)

    # f32 matmul path (strict check)
    out = jax.block_until_ready(imputation_forward(data, mask, params, use_BN=True))
    ref = reference_forward(data, mask, params, use_BN=True)
    assert out.shape == (B, dim)
    assert jnp.allclose(out, ref, atol=1e-4, rtol=1e-4), "f32 mismatch vs reference"

    # bf16 matmul-operand path (v6e/v7x MXU throughput; looser tolerance)
    out_bf16 = jax.block_until_ready(
        imputation_forward(data, mask, params, use_BN=True,
                           matmul_dtype=jnp.bfloat16))
    assert jnp.allclose(out_bf16, ref, atol=3e-2, rtol=3e-2), "bf16 mismatch"

    # ragged batch (exercises padded-row masking in the BN statistics)
    Br = 10
    data_r = jax.random.uniform(kd, (Br, dim), dtype=jnp.float32)
    mask_r = (jax.random.uniform(km, (Br, dim)) > 0.3).astype(jnp.float32)
    out_r = jax.block_until_ready(imputation_forward(data_r, mask_r, params))
    ref_r = reference_forward(data_r, mask_r, params)
    assert jnp.allclose(out_r, ref_r, atol=1e-4, rtol=1e-4), "ragged-B mismatch"

    # use_BN=False path
    out_nb = jax.block_until_ready(
        imputation_forward(data, mask, params, use_BN=False))
    ref_nb = reference_forward(data, mask, params, use_BN=False)
    assert jnp.allclose(out_nb, ref_nb, atol=1e-4, rtol=1e-4), "no-BN mismatch"

    print("KERNEL_OK")
</pallas_src>

<mosaic_0001>
module attributes {stable_mosaic.version = 11 : i64} {
  func.func @_layer1_kernel(%arg0: i32, %arg1: memref<8x128xf32, #tpu.memory_space<vmem>>, %arg2: memref<8x128xf32, #tpu.memory_space<vmem>>, %arg3: memref<128x128xf32, #tpu.memory_space<vmem>>, %arg4: memref<128x128xf32, #tpu.memory_space<vmem>>, %arg5: memref<1x128xf32, #tpu.memory_space<vmem>>, %arg6: memref<8x128xf32, #tpu.memory_space<vmem>>, %arg7: memref<1x128xf32, #tpu.memory_space<vmem>>, %arg8: memref<1x128xf32, #tpu.memory_space<vmem>>) attributes {dimension_semantics = [#tpu.dimension_semantics<arbitrary>], iteration_bounds = array<i64: 1>, scalar_prefetch = 0 : i64, scratch_operands = 0 : i64, tpu.core_type = #tpu.core_type<tc>, window_params = [{transform_indices = @transform_0, window_bounds = array<i64: 8, 128>}, {transform_indices = @transform_1, window_bounds = array<i64: 8, 128>}, {pipeline_mode = #tpu.pipeline_mode<synchronous>, transform_indices = @transform_2, window_bounds = array<i64: 128, 128>}, {pipeline_mode = #tpu.pipeline_mode<synchronous>, transform_indices = @transform_3, window_bounds = array<i64: 128, 128>}, {pipeline_mode = #tpu.pipeline_mode<synchronous>, transform_indices = @transform_4, window_bounds = array<i64: 1, 128>}, {transform_indices = @transform_5, window_bounds = array<i64: 8, 128>}, {pipeline_mode = #tpu.pipeline_mode<synchronous>, transform_indices = @transform_6, window_bounds = array<i64: 1, 128>}, {pipeline_mode = #tpu.pipeline_mode<synchronous>, transform_indices = @transform_7, window_bounds = array<i64: 1, 128>}]} {
    %c0 = arith.constant 0 : index
    %c0_0 = arith.constant 0 : index
    %0 = vector.load %arg1[%c0, %c0_0] : memref<8x128xf32, #tpu.memory_space<vmem>>, vector<8x128xf32>
    %c0_1 = arith.constant 0 : index
    %c0_2 = arith.constant 0 : index
    %1 = vector.load %arg3[%c0_1, %c0_2] : memref<128x128xf32, #tpu.memory_space<vmem>>, vector<128x128xf32>
    %cst = arith.constant dense<0.000000e+00> : vector<8x128xf32>
    %2 = tpu.matmul %0, %1, %cst {dimension_numbers = #tpu.dot_dimension_numbers<[1], [0], [0], [1], [0, 0, 1, 1], [], []>} : vector<8x128xf32>, vector<128x128xf32>, vector<8x128xf32> -> vector<8x128xf32>
    %c0_3 = arith.constant 0 : index
    %c0_4 = arith.constant 0 : index
    %3 = vector.load %arg2[%c0_3, %c0_4] : memref<8x128xf32, #tpu.memory_space<vmem>>, vector<8x128xf32>
    %c0_5 = arith.constant 0 : index
    %c0_6 = arith.constant 0 : index
    %4 = vector.load %arg4[%c0_5, %c0_6] : memref<128x128xf32, #tpu.memory_space<vmem>>, vector<128x128xf32>
    %cst_7 = arith.constant dense<0.000000e+00> : vector<8x128xf32>
    %5 = tpu.matmul %3, %4, %cst_7 {dimension_numbers = #tpu.dot_dimension_numbers<[1], [0], [0], [1], [0, 0, 1, 1], [], []>} : vector<8x128xf32>, vector<128x128xf32>, vector<8x128xf32> -> vector<8x128xf32>
    %6 = arith.addf %2, %5 : vector<8x128xf32>
    %c0_8 = arith.constant 0 : index
    %c0_9 = arith.constant 0 : index
    %7 = vector.load %arg5[%c0_8, %c0_9] : memref<1x128xf32, #tpu.memory_space<vmem>>, vector<1x128xf32>
    %8 = vector.broadcast %7 : vector<1x128xf32> to vector<8x128xf32>
    %9 = arith.addf %6, %8 : vector<8x128xf32>
    %cst_10 = arith.constant 0.000000e+00 : f32
    %10 = vector.broadcast %cst_10 : f32 to vector<8x128xf32>
    %11 = arith.maximumf %9, %10 : vector<8x128xf32>
    %c0_11 = arith.constant 0 : index
    %c0_12 = arith.constant 0 : index
    %12 = vector.load %arg6[%c0_11, %c0_12] : memref<8x128xf32, #tpu.memory_space<vmem>>, vector<8x128xf32>
    tpu.vector_store %arg6[%c0_11, %c0_12], %11 {strides = array<i32>} : memref<8x128xf32, #tpu.memory_space<vmem>>, vector<8x128xf32>,
    %cst_13 = arith.constant dense<0.000000e+00> : vector<128xf32>
    %13 = vector.multi_reduction <add>, %11, %cst_13 [0] : vector<8x128xf32> to vector<128xf32>
    %14 = vector.shape_cast %13 : vector<128xf32> to vector<1x128xf32>
    %15 = arith.mulf %11, %11 : vector<8x128xf32>
    %cst_14 = arith.constant dense<0.000000e+00> : vector<128xf32>
    %16 = vector.multi_reduction <add>, %15, %cst_14 [0] : vector<8x128xf32> to vector<128xf32>
    %17 = vector.shape_cast %16 : vector<128xf32> to vector<1x128xf32>
    %c0_i32 = arith.constant 0 : i32
    %18 = arith.cmpi eq, %arg0, %c0_i32 : i32
    %19 = arith.extui %18 : i1 to i32
    %c0_i32_15 = arith.constant 0 : i32
    %20 = arith.cmpi ne, %19, %c0_i32_15 : i32
    scf.if %20 {
      %c0_18 = arith.constant 0 : index
      %c0_19 = arith.constant 0 : index
      %24 = vector.load %arg7[%c0_18, %c0_19] : memref<1x128xf32, #tpu.memory_space<vmem>>, vector<1x128xf32>
      tpu.vector_store %arg7[%c0_18, %c0_19], %14 {strides = array<i32>} : memref<1x128xf32, #tpu.memory_space<vmem>>, vector<1x128xf32>,
      %c0_20 = arith.constant 0 : index
      %c0_21 = arith.constant 0 : index
      %25 = vector.load %arg8[%c0_20, %c0_21] : memref<1x128xf32, #tpu.memory_space<vmem>>, vector<1x128xf32>
      tpu.vector_store %arg8[%c0_20, %c0_21], %17 {strides = array<i32>} : memref<1x128xf32, #tpu.memory_space<vmem>>, vector<1x128xf32>,
    } else {
    }
    %c0_i32_16 = arith.constant 0 : i32
    %21 = arith.cmpi ne, %arg0, %c0_i32_16 : i32
    %22 = arith.extui %21 : i1 to i32
    %c0_i32_17 = arith.constant 0 : i32
    %23 = arith.cmpi ne, %22, %c0_i32_17 : i32
    scf.if %23 {
      %c0_18 = arith.constant 0 : index
      %c0_19 = arith.constant 0 : index
      %24 = vector.load %arg7[%c0_18, %c0_19] : memref<1x128xf32, #tpu.memory_space<vmem>>, vector<1x128xf32>
      %25 = arith.addf %24, %14 : vector<1x128xf32>
      %c0_20 = arith.constant 0 : index
      %c0_21 = arith.constant 0 : index
      %26 = vector.load %arg7[%c0_20, %c0_21] : memref<1x128xf32, #tpu.memory_space<vmem>>, vector<1x128xf32>
      tpu.vector_store %arg7[%c0_20, %c0_21], %25 {strides = array<i32>} : memref<1x128xf32, #tpu.memory_space<vmem>>, vector<1x128xf32>,
      %c0_22 = arith.constant 0 : index
      %c0_23 = arith.constant 0 : index
      %27 = vector.load %arg8[%c0_22, %c0_23] : memref<1x128xf32, #tpu.memory_space<vmem>>, vector<1x128xf32>
      %28 = arith.addf %27, %17 : vector<1x128xf32>
      %c0_24 = arith.constant 0 : index
      %c0_25 = arith.constant 0 : index
      %29 = vector.load %arg8[%c0_24, %c0_25] : memref<1x128xf32, #tpu.memory_space<vmem>>, vector<1x128xf32>
      tpu.vector_store %arg8[%c0_24, %c0_25], %28 {strides = array<i32>} : memref<1x128xf32, #tpu.memory_space<vmem>>, vector<1x128xf32>,
    } else {
    }
    return
  }
  func.func @transform_0(%arg0: i32) -> (i32, i32) {
    %c0_i32 = arith.constant 0 : i32
    %c0_i32_0 = arith.constant 0 : i32
    return %arg0, %c0_i32 : i32, i32
  }
  func.func @transform_1(%arg0: i32) -> (i32, i32) {
    %c0_i32 = arith.constant 0 : i32
    %c0_i32_0 = arith.constant 0 : i32
    return %arg0, %c0_i32 : i32, i32
  }
  func.func @transform_2(%arg0: i32) -> (i32, i32) {
    %c0_i32 = arith.constant 0 : i32
    %c0_i32_0 = arith.constant 0 : i32
    %c0_i32_1 = arith.constant 0 : i32
    return %c0_i32, %c0_i32_0 : i32, i32
  }
  func.func @transform_3(%arg0: i32) -> (i32, i32) {
    %c0_i32 = arith.constant 0 : i32
    %c0_i32_0 = arith.constant 0 : i32
    %c0_i32_1 = arith.constant 0 : i32
    return %c0_i32, %c0_i32_0 : i32, i32
  }
  func.func @transform_4(%arg0: i32) -> (i32, i32) {
    %c0_i32 = arith.constant 0 : i32
    %c0_i32_0 = arith.constant 0 : i32
    %c0_i32_1 = arith.constant 0 : i32
    return %c0_i32, %c0_i32_0 : i32, i32
  }
  func.func @transform_5(%arg0: i32) -> (i32, i32) {
    %c0_i32 = arith.constant 0 : i32
    %c0_i32_0 = arith.constant 0 : i32
    return %arg0, %c0_i32 : i32, i32
  }
  func.func @transform_6(%arg0: i32) -> (i32, i32) {
    %c0_i32 = arith.constant 0 : i32
    %c0_i32_0 = arith.constant 0 : i32
    %c0_i32_1 = arith.constant 0 : i32
    return %c0_i32, %c0_i32_0 : i32, i32
  }
  func.func @transform_7(%arg0: i32) -> (i32, i32) {
    %c0_i32 = arith.constant 0 : i32
    %c0_i32_0 = arith.constant 0 : i32
    %c0_i32_1 = arith.constant 0 : i32
    return %c0_i32, %c0_i32_0 : i32, i32
  }
}

</mosaic_0001>

<llo_original>
// kernel: tpu_custom_call.1
$region0: #{tpu_custom_call.1}
  #allocation0 [shape = 'u32[]', space=smem, size = 0x4, offset = 0x4, fixed_abs, tag = 'smem constant byte address 0x4 - core index']
  #allocation1 [shape = 'u32[72,128]{1,0:T(1,128)}', space=vmem, size = 0x9000, scoped, tag = 'internal scratch']
  %s0 = inlined_call_operand.hbm [shape: f32[8,128], index: 0, kind: input, shape index: {}]
  %s1 = inlined_call_operand.hbm [shape: f32[8,128], index: 1, kind: input, shape index: {}]
  %s2 = inlined_call_operand.hbm [shape: f32[128,128], index: 2, kind: input, shape index: {}]
  %s3 = inlined_call_operand.hbm [shape: f32[128,128], index: 3, kind: input, shape index: {}]
  %s4 = inlined_call_operand.vmem [shape: f32[1,128], index: 4, kind: input, shape index: {}]
  %s5 = inlined_call_operand.hbm [shape: f32[8,128], index: 5, kind: output, shape index: {0}]
  %s6 = inlined_call_operand.hbm [shape: f32[1,128], index: 6, kind: output, shape index: {1}]
  %s7 = inlined_call_operand.hbm [shape: f32[1,128], index: 7, kind: output, shape index: {2}]
  %8 = xla_tuple %s5, %s6, %s7
  %s9 = sld [smem:[#allocation0]]
  $region70: #{tpu_custom_call.1} parent=0
    _
  %s11 = ssub.s32 1, %s9
  %s12 = scalar_select 0, %s11, %s9
  $region1: #{tpu_custom_call.1} parent=0
    #allocation2 [shape = 'u8[4096]{0}', space=vmem, size = 0x1000, scoped, tag = 'input window, operand 0, single buffered']
    #allocation3 [shape = 's32[1]{0}', space=sflag, size = 0x4, scoped, tag = 'scoped memory for tpu_custom_call.1']
    #allocation4 [shape = 's32[1]{0}', space=sflag, size = 0x4, scoped, tag = 'scoped memory for tpu_custom_call.1']
    #allocation5 [shape = 'u8[4096]{0}', space=vmem, size = 0x1000, scoped, tag = 'input window, operand 1, single buffered']
    #allocation6 [shape = 's32[1]{0}', space=sflag, size = 0x4, scoped, tag = 'scoped memory for tpu_custom_call.1']
    #allocation7 [shape = 'u8[65536]{0}', space=vmem, size = 0x10000, scoped, tag = 'input window, operand 2, single buffered']
    #allocation8 [shape = 'u8[65536]{0}', space=vmem, size = 0x10000, scoped, tag = 'input window, operand 3, single buffered']
    #allocation9 [shape = 's32[1]{0}', space=sflag, size = 0x4, scoped, tag = 'scoped memory for tpu_custom_call.1']
    #allocation10 [shape = 'u8[4096]{0}', space=vmem, size = 0x1000, scoped, tag = 'output window, operand 0, single buffered']
    #allocation11 [shape = 'u8[512]{0}', space=vmem, size = 0x400, scoped, tag = 'output window, operand 1, single buffered']
    #allocation12 [shape = 's32[1]{0}', space=sflag, size = 0x4, scoped, tag = 'scoped memory for tpu_custom_call.1']
    #allocation13 [shape = 'u8[512]{0}', space=vmem, size = 0x400, scoped, tag = 'output window, operand 2, single buffered']
    %13 = vsyncpa [#allocation3], 0
    %14 = vsyncpa [#allocation6], 0
    %15 = vsyncpa [#allocation9], 0
    %16 = vsyncpa [#allocation4], 0
    %17 = vsyncpa [#allocation12], 0
    // Predicated region
    $region2: #{tpu_custom_call.1} parent=1 // pred_check
      _
    $region3: #{tpu_custom_call.1} parent=1 // pred_check_branch
      %19 = sbr.rel (0) target = $region5
    $region4: #{tpu_custom_call.1} parent=1 // pred_region
      %21 = vsyncadd [#allocation3], 0
      %s23 = sshll.u32 %s0, 4
      %s24 = int_to_ptr.hbm [resolvable:$true] %s23
      %s25 = sshll.u32 [#allocation2], 4
      %s26 = int_to_ptr.vmem [resolvable:$true] %s25
      %28 = dma.hbm_to_vmem [thread:$0]  %s24, 128, %s26, [#allocation3]
    $region5: #{tpu_custom_call.1} parent=1 // pred_fallthru
      _
    // Predicated region
    $region6: #{tpu_custom_call.1} parent=1 // pred_check
      _
    $region7: #{tpu_custom_call.1} parent=1 // pred_check_branch
      %30 = sbr.rel (0) target = $region9
    $region8: #{tpu_custom_call.1} parent=1 // pred_region
      %32 = vsyncadd [#allocation6], 0
      %s34 = sshll.u32 %s1, 4
      %s35 = int_to_ptr.hbm [resolvable:$true] %s34
      %s36 = sshll.u32 [#allocation5], 4
      %s37 = int_to_ptr.vmem [resolvable:$true] %s36
      %39 = dma.hbm_to_vmem [thread:$0]  %s35, 128, %s37, [#allocation6]
    $region9: #{tpu_custom_call.1} parent=1 // pred_fallthru
      _
    // Predicated region
    $region10: #{tpu_custom_call.1} parent=1 // pred_check
      _
    $region11: #{tpu_custom_call.1} parent=1 // pred_check_branch
      %41 = sbr.rel (0) target = $region13
    $region12: #{tpu_custom_call.1} parent=1 // pred_region
      %43 = vsyncadd [#allocation6], 0
      %s44 = sshll.u32 %s2, 4
      %s45 = int_to_ptr.hbm [resolvable:$true] %s44
      %s46 = sshll.u32 [#allocation7], 4
      %s47 = int_to_ptr.vmem [resolvable:$true] %s46
      %52 = dma.hbm_to_vmem [thread:$0]  %s45, 2048, %s47, [#allocation6], 128, 128, 8
    $region13: #{tpu_custom_call.1} parent=1 // pred_fallthru
      _
    // Predicated region
    $region14: #{tpu_custom_call.1} parent=1 // pred_check
      _
    $region15: #{tpu_custom_call.1} parent=1 // pred_check_branch
      %54 = sbr.rel (0) target = $region17
    $region16: #{tpu_custom_call.1} parent=1 // pred_region
      %56 = vsyncadd [#allocation9], 0
      %s57 = sshll.u32 %s3, 4
      %s58 = int_to_ptr.hbm [resolvable:$true] %s57
      %s59 = sshll.u32 [#allocation8], 4
      %s60 = int_to_ptr.vmem [resolvable:$true] %s59
      %65 = dma.hbm_to_vmem [thread:$0]  %s58, 2048, %s60, [#allocation9], 128, 128, 8
    $region17: #{tpu_custom_call.1} parent=1 // pred_fallthru
      _
    // Predicated region
    $region18: #{tpu_custom_call.1} parent=1 // pred_check
      _
    $region19: #{tpu_custom_call.1} parent=1 // pred_check_branch
      %67 = sbr.rel (0) target = $region21
    $region20: #{tpu_custom_call.1} parent=1 // pred_region
      _
    $region21: #{tpu_custom_call.1} parent=1 // pred_fallthru
      _
    // Predicated region
    $region22: #{tpu_custom_call.1} parent=1 // pred_check
      _
    $region23: #{tpu_custom_call.1} parent=1 // pred_check_branch
      %69 = sbr.rel (0) target = $region25
    $region24: #{tpu_custom_call.1} parent=1 // pred_region
      %71 = dma.done [#allocation3], 128
    $region25: #{tpu_custom_call.1} parent=1 // pred_fallthru
      _
    // Predicated region
    $region26: #{tpu_custom_call.1} parent=1 // pred_check
      _
    $region27: #{tpu_custom_call.1} parent=1 // pred_check_branch
      %73 = sbr.rel (0) target = $region29
    $region28: #{tpu_custom_call.1} parent=1 // pred_region
      %75 = dma.done [#allocation6], 128
    $region29: #{tpu_custom_call.1} parent=1 // pred_fallthru
      _
    // Predicated region
    $region30: #{tpu_custom_call.1} parent=1 // pred_check
      _
    $region31: #{tpu_custom_call.1} parent=1 // pred_check_branch
      %77 = sbr.rel (0) target = $region33
    $region32: #{tpu_custom_call.1} parent=1 // pred_region
      %79 = dma.done [#allocation6], 2048
    $region33: #{tpu_custom_call.1} parent=1 // pred_fallthru
      _
    // Predicated region
    $region34: #{tpu_custom_call.1} parent=1 // pred_check
      _
    $region35: #{tpu_custom_call.1} parent=1 // pred_check_branch
      %81 = sbr.rel (0) target = $region37
    $region36: #{tpu_custom_call.1} parent=1 // pred_region
      %83 = dma.done [#allocation9], 2048
    $region37: #{tpu_custom_call.1} parent=1 // pred_fallthru
      _
    %v84 = vld [vmem:[#allocation2] sm:$0xff]
    %v85 = vld [vmem:[#allocation7] sm:$0xff]
    %v86 = vld [vmem:[#allocation7 + $0x8] sm:$0xff]
    %v87 = vld [vmem:[#allocation7 + $0x10] sm:$0xff]
    %v88 = vld [vmem:[#allocation7 + $0x18] sm:$0xff]
    %v89 = vld [vmem:[#allocation7 + $0x20] sm:$0xff]
    %v90 = vld [vmem:[#allocation7 + $0x28] sm:$0xff]
    %v91 = vld [vmem:[#allocation7 + $0x30] sm:$0xff]
    %v92 = vld [vmem:[#allocation7 + $0x38] sm:$0xff]
    %v93 = vld [vmem:[#allocation7 + $0x40] sm:$0xff]
    %v94 = vld [vmem:[#allocation7 + $0x48] sm:$0xff]
    %v95 = vld [vmem:[#allocation7 + $0x50] sm:$0xff]
    %v96 = vld [vmem:[#allocation7 + $0x58] sm:$0xff]
    %v97 = vld [vmem:[#allocation7 + $0x60] sm:$0xff]
    %v98 = vld [vmem:[#allocation7 + $0x68] sm:$0xff]
    %v99 = vld [vmem:[#allocation7 + $0x70] sm:$0xff]
    %v100 = vld [vmem:[#allocation7 + $0x78] sm:$0xff]
    %v101 = vld [vmem:[#allocation5] sm:$0xff]
    %v102 = vld [vmem:[#allocation8] sm:$0xff]
    %v103 = vld [vmem:[#allocation8 + $0x8] sm:$0xff]
    %v104 = vld [vmem:[#allocation8 + $0x10] sm:$0xff]
    %v105 = vld [vmem:[#allocation8 + $0x18] sm:$0xff]
    %v106 = vld [vmem:[#allocation8 + $0x20] sm:$0xff]
    %v107 = vld [vmem:[#allocation8 + $0x28] sm:$0xff]
    %v108 = vld [vmem:[#allocation8 + $0x30] sm:$0xff]
    %v109 = vld [vmem:[#allocation8 + $0x38] sm:$0xff]
    %v110 = vld [vmem:[#allocation8 + $0x40] sm:$0xff]
    %v111 = vld [vmem:[#allocation8 + $0x48] sm:$0xff]
    %v112 = vld [vmem:[#allocation8 + $0x50] sm:$0xff]
    %v113 = vld [vmem:[#allocation8 + $0x58] sm:$0xff]
    %v114 = vld [vmem:[#allocation8 + $0x60] sm:$0xff]
    %v115 = vld [vmem:[#allocation8 + $0x68] sm:$0xff]
    %v116 = vld [vmem:[#allocation8 + $0x70] sm:$0xff]
    %v117 = vld [vmem:[#allocation8 + $0x78] sm:$0xff]
    %118 = vmatpush.msra.mxu0 %v117
    %119 = vmatpush.msra.mxu0 %v116
    %120 = vmatpush.msra.mxu0 %v115
    %121 = vmatpush.msra.mxu0 %v114
    %122 = vmatpush.msra.mxu0 %v113
    %123 = vmatpush.msra.mxu0 %v112
    %124 = vmatpush.msra.mxu0 %v111
    %125 = vmatpush.msra.mxu0 %v110
    %126 = vmatpush.msra.mxu0 %v109
    %127 = vmatpush.msra.mxu0 %v108
    %128 = vmatpush.msra.mxu0 %v107
    %129 = vmatpush.msra.mxu0 %v106
    %130 = vmatpush.msra.mxu0 %v105
    %131 = vmatpush.msra.mxu0 %v104
    %132 = vmatpush.msra.mxu0 %v103
    %133 = vmatpush.msra.mxu0 %v102
    %134 = vmatmul.f32.gmra.mxu0 %v101
    %v135 = vpop.f32.mrf.mxu0
    %v136 = vadd.f32 0.0, %v135
    %137 = vdwg.mxu0
    %138 = vmatpush.msra.mxu0 %v100
    %139 = vmatpush.msra.mxu0 %v99
    %140 = vmatpush.msra.mxu0 %v98
    %141 = vmatpush.msra.mxu0 %v97
    %142 = vmatpush.msra.mxu0 %v96
    %143 = vmatpush.msra.mxu0 %v95
    %144 = vmatpush.msra.mxu0 %v94
    %145 = vmatpush.msra.mxu0 %v93
    %146 = vmatpush.msra.mxu0 %v92
    %147 = vmatpush.msra.mxu0 %v91
    %148 = vmatpush.msra.mxu0 %v90
    %149 = vmatpush.msra.mxu0 %v89
    %150 = vmatpush.msra.mxu0 %v88
    %151 = vmatpush.msra.mxu0 %v87
    %152 = vmatpush.msra.mxu0 %v86
    %153 = vmatpush.msra.mxu0 %v85
    %154 = vmatmul.f32.gmra.mxu0 %v84
    %v155 = vpop.f32.mrf.mxu0
    %v156 = vadd.f32 %v136, %v155
    %157 = vdwg.mxu0
    %v158 = vld [vmem:[%s4] sm:$0x1]
    %v160 = vperm.slane %v158, 0
    %v162 = vadd.f32 %v156, %v160
    %v163 = vmax.f32 %v162, 0.0
    %164 = vst [vmem:[#allocation10] sm:$0xff] %v163
    %v165 = vrot.slane %v163, 4
    %v166 = vadd.f32 %v163, %v165
    %v167 = vrot.slane %v166, 2
    %v168 = vadd.f32 %v166, %v167
    %v169 = vrot.slane %v168, 1
    %v170 = vadd.f32 %v168, %v169
    %v171 = vmul.f32 %v163, %v163
    %v172 = vrot.slane %v171, 4
    %v173 = vadd.f32 %v171, %v172
    %v174 = vrot.slane %v173, 2
    %v175 = vadd.f32 %v173, %v174
    %v176 = vrot.slane %v175, 1
    %v177 = vadd.f32 %v175, %v176
    %p178 = scmp.eq.s32.totalorder 0, 0
    // Predicated region
    $region38: #{tpu_custom_call.1} parent=1 // pred_check
      %p179 = pneg %p178
    $region39: #{tpu_custom_call.1} parent=1 // pred_check_branch
      %181 = sbr.rel (%p179) target = $region41
    $region40: #{tpu_custom_call.1} parent=1 // pred_region
      %182 = vst [vmem:[#allocation11] sm:$0x1] %v170
      %183 = vst [vmem:[#allocation13] sm:$0x1] %v177
    $region41: #{tpu_custom_call.1} parent=1 // pred_fallthru
      _
    %p184 = scmp.ne.s32.totalorder 0, 0
    // Predicated region
    $region42: #{tpu_custom_call.1} parent=1 // pred_check
      %p185 = pneg %p184
    $region43: #{tpu_custom_call.1} parent=1 // pred_check_branch
      %187 = sbr.rel (%p185) target = $region45
    $region44: #{tpu_custom_call.1} parent=1 // pred_region
      %v188 = vld [vmem:[#allocation11] sm:$0x1]
      %v189 = vadd.f32 %v188, %v170
      %190 = vst [vmem:[#allocation11] sm:$0x1] %v189
      %v191 = vld [vmem:[#allocation13] sm:$0x1]
      %v192 = vadd.f32 %v191, %v177
      %193 = vst [vmem:[#allocation13] sm:$0x1] %v192
    $region45: #{tpu_custom_call.1} parent=1 // pred_fallthru
      _
    // Predicated region
    $region46: #{tpu_custom_call.1} parent=1 // pred_check
      _
    $region47: #{tpu_custom_call.1} parent=1 // pred_check_branch
      %195 = sbr.rel (0) target = $region49
    $region48: #{tpu_custom_call.1} parent=1 // pred_region
      %197 = vsyncadd [#allocation4], 0
      %s199 = sshll.u32 [#allocation10], 4
      %s200 = int_to_ptr.vmem [resolvable:$true] %s199
      %s201 = sshll.u32 %s5, 4
      %s202 = int_to_ptr.hbm [resolvable:$true] %s201
      %204 = dma.vmem_to_hbm [thread:$0]  %s200, 128, %s202, [#allocation4]
    $region49: #{tpu_custom_call.1} parent=1 // pred_fallthru
      _
    // Predicated region
    $region50: #{tpu_custom_call.1} parent=1 // pred_check
      _
    $region51: #{tpu_custom_call.1} parent=1 // pred_check_branch
      %206 = sbr.rel (0) target = $region53
    $region52: #{tpu_custom_call.1} parent=1 // pred_region
      %208 = vsyncadd [#allocation12], 0
      %s210 = sshll.u32 [#allocation11], 4
      %s211 = int_to_ptr.vmem [resolvable:$true] %s210
      %s212 = sshll.u32 %s6, 4
      %s213 = int_to_ptr.hbm [resolvable:$true] %s212
      %215 = dma.vmem_to_hbm [thread:$0]  %s211, 16, %s213, [#allocation12]
    $region53: #{tpu_custom_call.1} parent=1 // pred_fallthru
      _
    // Predicated region
    $region54: #{tpu_custom_call.1} parent=1 // pred_check
      _
    $region55: #{tpu_custom_call.1} parent=1 // pred_check_branch
      %217 = sbr.rel (0) target = $region57
    $region56: #{tpu_custom_call.1} parent=1 // pred_region
      %219 = vsyncadd [#allocation12], 0
      %s221 = sshll.u32 [#allocation13], 4
      %s222 = int_to_ptr.vmem [resolvable:$true] %s221
      %s223 = sshll.u32 %s7, 4
      %s224 = int_to_ptr.hbm [resolvable:$true] %s223
      %226 = dma.vmem_to_hbm [thread:$0]  %s222, 16, %s224, [#allocation12]
    $region57: #{tpu_custom_call.1} parent=1 // pred_fallthru
      _
    // Predicated region
    $region58: #{tpu_custom_call.1} parent=1 // pred_check
      _
    $region59: #{tpu_custom_call.1} parent=1 // pred_check_branch
      %228 = sbr.rel (0) target = $region61
    $region60: #{tpu_custom_call.1} parent=1 // pred_region
      %230 = dma.done [#allocation4], 128
    $region61: #{tpu_custom_call.1} parent=1 // pred_fallthru
      _
    // Predicated region
    $region62: #{tpu_custom_call.1} parent=1 // pred_check
      _
    $region63: #{tpu_custom_call.1} parent=1 // pred_check_branch
      %232 = sbr.rel (0) target = $region65
    $region64: #{tpu_custom_call.1} parent=1 // pred_region
      %234 = dma.done [#allocation12], 16
    $region65: #{tpu_custom_call.1} parent=1 // pred_fallthru
      _
    // Predicated region
    $region66: #{tpu_custom_call.1} parent=1 // pred_check
      _
    $region67: #{tpu_custom_call.1} parent=1 // pred_check_branch
      %236 = sbr.rel (0) target = $region69
    $region68: #{tpu_custom_call.1} parent=1 // pred_region
      %238 = dma.done [#allocation12], 16
    $region69: #{tpu_custom_call.1} parent=1 // pred_fallthru
      _
    %239 = vsyncpa [#allocation3], 1
    %240 = vsyncpa [#allocation6], 1
    %241 = vsyncpa [#allocation9], 1
    %242 = vsyncpa [#allocation4], 1
    %243 = vsyncpa [#allocation12], 1

</llo_original>
